<compile_context>
chip_gen: v5e
topology: v5e:2x2
jax: 0.10.0
libtpu: 0.0.40
codegen_flags: <defaults>
</compile_context>

<pallas_src>
import functools
import math

import jax
import jax.numpy as jnp
import numpy as np
from jax.experimental import pallas as pl
from jax.experimental.pallas import tpu as pltpu


def demo_kernel(x_ref, wc_ref, wfbd_ref, bf_ref, o_ref, *, seg_len):
    # x_ref   : (Cin, B*L)       batch-packed input            (VMEM)
    # wc_ref  : (Cout, 3*Cin+1)  fused conv weight [w0|w1|w2|b] (VMEM)
    # wfbd_ref: (B*L, B)         block-diagonal fc weight       (VMEM)
    # bf_ref  : (1, 1)           fc bias                        (SMEM scalar)
    # o_ref   : (Cout, B)        lane-dense output              (VMEM)
    x = x_ref[...]
    cin, bl = x.shape

    # Column index within each length-`seg_len` segment (= one batch element).
    col = jax.lax.broadcasted_iota(jnp.int32, (cin, bl), 1) % seg_len
    zeros = jnp.zeros_like(x)

    # x[l-1]: roll right by 1 (XLU). The roll wraps the previous segment's last
    # column into each segment's left edge; the mask zeroes it (conv zero-pad).
    x_m = jnp.where(col != 0, pltpu.roll(x, 1, 1), zeros)
    # x[l+1]: roll left by 1 (== roll right by bl-1); mask each right edge.
    x_p = jnp.where(col != seg_len - 1, pltpu.roll(x, bl - 1, 1), zeros)

    ones = jnp.ones((1, bl), x.dtype)
    xs = jnp.concatenate([x_m, x, x_p, ones], axis=0)        # (3*Cin+1, B*L)

    # Conv1d(kernel=3, padding=1) + bias as ONE MXU matmul, then ReLU.
    conv = jnp.dot(wc_ref[...], xs, preferred_element_type=jnp.float32)
    h = jnp.maximum(conv, 0.0)                                # (Cout, B*L)

    # Linear(L -> 1) per batch element via block-diagonal weight -> (Cout, B).
    logits = (
        jnp.dot(h, wfbd_ref[...], preferred_element_type=jnp.float32)
        + bf_ref[0, 0]
    )
    o_ref[...] = jax.nn.sigmoid(logits).astype(o_ref.dtype)


def demo_forward(x, w_conv, b_conv, w_fc, b_fc):
    """x: (B, Cin, L) f32; conv weight (Cout, Cin, 3); fc weight (1, L)."""
    B, Cin, L = x.shape
    Cout = w_conv.shape[0]
    BL = B * L

    # --- glue / layout plumbing (done once, outside the kernel) ---
    # Batch packed along lanes: (Cin, B*L)  (= (4, 128) for B=2, L=64).
    x_packed = jnp.transpose(x, (1, 0, 2)).reshape(Cin, BL)
    # Fused conv weight: the 3 taps side-by-side plus the conv bias column.
    wc = jnp.concatenate(
        [w_conv[:, :, 0], w_conv[:, :, 1], w_conv[:, :, 2],
         jnp.reshape(b_conv, (Cout, 1))],
        axis=1,
    ).astype(jnp.float32)
    # Block-diagonal fc weight: column b carries w_fc over rows [b*L, (b+1)*L).
    wfbd = jnp.kron(jnp.eye(B, dtype=jnp.float32), jnp.reshape(w_fc, (L, 1)))
    bf = jnp.reshape(b_fc, (1, 1)).astype(jnp.float32)

    out = pl.pallas_call(
        functools.partial(demo_kernel, seg_len=L),
        out_shape=jax.ShapeDtypeStruct((Cout, B), jnp.float32),
        in_specs=[
            pl.BlockSpec(memory_space=pltpu.MemorySpace.VMEM),   # x_packed
            pl.BlockSpec(memory_space=pltpu.MemorySpace.VMEM),   # fused conv W
            pl.BlockSpec(memory_space=pltpu.MemorySpace.VMEM),   # block-diag fc W
            pl.BlockSpec(memory_space=pltpu.MemorySpace.SMEM),   # fc bias scalar
        ],
        out_specs=pl.BlockSpec(memory_space=pltpu.MemorySpace.VMEM),
    )(x_packed, wc, wfbd, bf)

    # (Cout, B) -> (B, Cout, 1), matching the PyTorch output shape.
    return jnp.transpose(out, (1, 0)).reshape(B, Cout, 1)


def reference_forward(x, w_conv, b_conv, w_fc, b_fc):
    conv = jax.lax.conv_general_dilated(
        x, w_conv, window_strides=(1,), padding=((1, 1),),
        dimension_numbers=("NCH", "OIH", "NCH"),
    ) + b_conv[None, :, None]
    h = jnp.maximum(conv, 0.0)
    logits = jnp.einsum("bcl,l->bc", h, w_fc[0]) + b_fc[0]
    return jax.nn.sigmoid(logits)[..., None]


if __name__ == "__main__":
    # Small shapes consistent with the forward pass:
    # in_channel=4, seq_len=8  =>  fc expects last dim L = seq_len*8 = 64.
    B, Cin, Cout, SEQ_LEN = 2, 4, 8, 8
    L = SEQ_LEN * 8  # 64  (B*L = 128 -> one full lane dimension)

    key = jax.random.PRNGKey(0)
    kx, k1, k2, k3, k4 = jax.random.split(key, 5)

    # Deterministic parameter init (PyTorch-style uniform fan-in bounds).
    bc_bound = 1.0 / math.sqrt(Cin * 3)
    fc_bound = 1.0 / math.sqrt(L)
    w_conv = jax.random.uniform(k1, (Cout, Cin, 3), jnp.float32, -bc_bound, bc_bound)
    b_conv = jax.random.uniform(k2, (Cout,), jnp.float32, -bc_bound, bc_bound)
    w_fc = jax.random.uniform(k3, (1, L), jnp.float32, -fc_bound, fc_bound)
    b_fc = jax.random.uniform(k4, (1,), jnp.float32, -fc_bound, fc_bound)

    x = jax.random.normal(kx, (B, Cin, L), jnp.float32)

    out = jax.block_until_ready(demo_forward(x, w_conv, b_conv, w_fc, b_fc))

    ref = reference_forward(x, w_conv, b_conv, w_fc, b_fc)
    np.testing.assert_allclose(np.asarray(out), np.asarray(ref), rtol=1e-4, atol=1e-5)

    print("KERNEL_OK")
</pallas_src>

<mosaic_0001>
module attributes {stable_mosaic.version = 11 : i64} {
  func.func @demo_kernel(%arg0: memref<4x128xf32, #tpu.memory_space<vmem>>, %arg1: memref<8x13xf32, #tpu.memory_space<vmem>>, %arg2: memref<128x2xf32, #tpu.memory_space<vmem>>, %arg3: memref<1x1xf32, #tpu.memory_space<smem>>, %arg4: memref<8x2xf32, #tpu.memory_space<vmem>>) attributes {dimension_semantics = [], scalar_prefetch = 0 : i64, scratch_operands = 0 : i64, tpu.core_type = #tpu.core_type<tc>} {
    %c0 = arith.constant 0 : index
    %c0_0 = arith.constant 0 : index
    %0 = vector.load %arg0[%c0, %c0_0] : memref<4x128xf32, #tpu.memory_space<vmem>>, vector<4x128xf32>
    %1 = tpu.iota {dimensions = array<i32: 1>} : vector<4x128xi32>
    %c64_i32 = arith.constant 64 : i32
    %c0_i32 = arith.constant 0 : i32
    %2 = arith.cmpi eq, %c64_i32, %c0_i32 : i32
    %c1_i32 = arith.constant 1 : i32
    %3 = arith.select %2, %c1_i32, %c64_i32 : i32
    %4 = vector.broadcast %3 : i32 to vector<4x128xi32>
    %5 = arith.remsi %1, %4 : vector<4x128xi32>
    %c0_i32_1 = arith.constant 0 : i32
    %6 = vector.broadcast %c0_i32_1 : i32 to vector<4x128xi32>
    %7 = arith.cmpi ne, %5, %6 : vector<4x128xi32>
    %c0_i32_2 = arith.constant 0 : i32
    %8 = vector.broadcast %c0_i32_2 : i32 to vector<4x128xi32>
    %9 = arith.cmpi slt, %5, %8 : vector<4x128xi32>
    %c0_i32_3 = arith.constant 0 : i32
    %10 = arith.cmpi slt, %3, %c0_i32_3 : i32
    %11 = vector.broadcast %10 : i1 to vector<4x128xi1>
    %12 = vector.broadcast %11 : vector<4x128xi1> to vector<4x128xi1>
    %13 = arith.xori %9, %12 : vector<4x128xi1>
    %14 = arith.andi %13, %7 : vector<4x128xi1>
    %15 = vector.broadcast %3 : i32 to vector<4x128xi32>
    %16 = arith.addi %5, %15 : vector<4x128xi32>
    %17 = arith.select %14, %16, %5 : vector<4x128xi1>, vector<4x128xi32>
    %cst = arith.constant 0.000000e+00 : f32
    %18 = vector.broadcast %cst : f32 to vector<4x128xf32>
    %c0_i32_4 = arith.constant 0 : i32
    %19 = vector.broadcast %c0_i32_4 : i32 to vector<4x128xi32>
    %20 = arith.cmpi ne, %17, %19 : vector<4x128xi32>
    %c1_i32_5 = arith.constant 1 : i32
    %21 = tpu.dynamic_rotate %0 by %c1_i32_5 dim 1 : vector<4x128xf32>, i32 -> vector<4x128xf32>
    %22 = arith.select %20, %21, %18 : vector<4x128xi1>, vector<4x128xf32>
    %c63_i32 = arith.constant 63 : i32
    %23 = vector.broadcast %c63_i32 : i32 to vector<4x128xi32>
    %24 = arith.cmpi ne, %17, %23 : vector<4x128xi32>
    %c127_i32 = arith.constant 127 : i32
    %25 = tpu.dynamic_rotate %0 by %c127_i32 dim 1 : vector<4x128xf32>, i32 -> vector<4x128xf32>
    %26 = arith.select %24, %25, %18 : vector<4x128xi1>, vector<4x128xf32>
    %cst_6 = arith.constant 1.000000e+00 : f32
    %27 = vector.broadcast %cst_6 : f32 to vector<1x128xf32>
    %28 = tpu.concatenate %22, %0, %26, %27 in 0 : vector<4x128xf32>, vector<4x128xf32>, vector<4x128xf32>, vector<1x128xf32> -> vector<13x128xf32>
    %c0_7 = arith.constant 0 : index
    %c0_8 = arith.constant 0 : index
    %29 = vector.load %arg1[%c0_7, %c0_8] : memref<8x13xf32, #tpu.memory_space<vmem>>, vector<8x13xf32>
    %cst_9 = arith.constant dense<0.000000e+00> : vector<8x128xf32>
    %30 = tpu.matmul %29, %28, %cst_9 {dimension_numbers = #tpu.dot_dimension_numbers<[1], [0], [0], [1], [0, 0, 1, 1], [], []>} : vector<8x13xf32>, vector<13x128xf32>, vector<8x128xf32> -> vector<8x128xf32>
    %cst_10 = arith.constant 0.000000e+00 : f32
    %31 = vector.broadcast %cst_10 : f32 to vector<8x128xf32>
    %32 = arith.maximumf %30, %31 : vector<8x128xf32>
    %c0_11 = arith.constant 0 : index
    %c0_12 = arith.constant 0 : index
    %33 = vector.load %arg2[%c0_11, %c0_12] : memref<128x2xf32, #tpu.memory_space<vmem>>, vector<128x2xf32>
    %cst_13 = arith.constant dense<0.000000e+00> : vector<8x2xf32>
    %34 = tpu.matmul %32, %33, %cst_13 {dimension_numbers = #tpu.dot_dimension_numbers<[1], [0], [0], [1], [0, 0, 1, 1], [], []>} : vector<8x128xf32>, vector<128x2xf32>, vector<8x2xf32> -> vector<8x2xf32>
    %c0_14 = arith.constant 0 : index
    %c0_15 = arith.constant 0 : index
    %35 = memref.load %arg3[%c0_14, %c0_15] : memref<1x1xf32, #tpu.memory_space<smem>>
    %36 = vector.broadcast %35 : f32 to vector<8x2xf32>
    %37 = arith.addf %34, %36 : vector<8x2xf32>
    %38 = arith.negf %37 : vector<8x2xf32>
    %39 = math.exp %38 : vector<8x2xf32>
    %cst_16 = arith.constant 1.000000e+00 : f32
    %40 = vector.broadcast %cst_16 : f32 to vector<8x2xf32>
    %41 = arith.addf %40, %39 : vector<8x2xf32>
    %42 = arith.divf %40, %41 : vector<8x2xf32>
    %c0_17 = arith.constant 0 : index
    %c0_18 = arith.constant 0 : index
    %43 = vector.load %arg4[%c0_17, %c0_18] : memref<8x2xf32, #tpu.memory_space<vmem>>, vector<8x2xf32>
    tpu.vector_store %arg4[%c0_17, %c0_18], %42 {strides = array<i32>} : memref<8x2xf32, #tpu.memory_space<vmem>>, vector<8x2xf32>,
    return
  }
}

</mosaic_0001>

<llo_original>
// kernel: tpu_custom_call.1
$region0: #{tpu_custom_call.1}
  #allocation0 [shape = 'u32[]', space=smem, size = 0x4, offset = 0x4, fixed_abs, tag = 'smem constant byte address 0x4 - core index']
  #allocation1 [shape = 'u32[72,128]{1,0:T(1,128)}', space=vmem, size = 0x9000, scoped, tag = 'internal scratch']
  #allocation2 [shape = 'f32[1,1]{1,0:T(1,128)S(6)}', space=smem, size = 0x200, scoped, tag = 'scoped memory for tpu_custom_call.1']
  %s0 = inlined_call_operand.vmem [shape: f32[4,128], index: 0, kind: input, shape index: {}]
  %s1 = inlined_call_operand.vmem [shape: f32[8,13], index: 1, kind: input, shape index: {}]
  %s2 = inlined_call_operand.vmem [shape: f32[128,2], index: 2, kind: input, shape index: {}]
  %s3 = inlined_call_operand.<no memory space> [shape: f32[1,1], index: 3, kind: input, shape index: {}]
  %s4 = inlined_call_operand.vmem [shape: f32[8,2], index: 4, kind: output, shape index: {}]
  %s5 = sld [smem:[#allocation0]]
  $region26: #{tpu_custom_call.1} parent=0
    _
  %s7 = ssub.s32 1, %s5
  %s8 = scalar_select 0, %s7, %s5
  %9 = sst [smem:[#allocation2]] %s3
  // Predicated region
  $region2: #{tpu_custom_call.1} parent=0 // pred_check
    _
  $region3: #{tpu_custom_call.1} parent=0 // pred_check_branch
    %11 = sbr.rel (0) target = $region5
  $region4: #{tpu_custom_call.1} parent=0 // pred_region
    _
  $region5: #{tpu_custom_call.1} parent=0 // pred_fallthru
    _
  // Predicated region
  $region6: #{tpu_custom_call.1} parent=0 // pred_check
    _
  $region7: #{tpu_custom_call.1} parent=0 // pred_check_branch
    %13 = sbr.rel (0) target = $region9
  $region8: #{tpu_custom_call.1} parent=0 // pred_region
    _
  $region9: #{tpu_custom_call.1} parent=0 // pred_fallthru
    _
  // Predicated region
  $region10: #{tpu_custom_call.1} parent=0 // pred_check
    _
  $region11: #{tpu_custom_call.1} parent=0 // pred_check_branch
    %15 = sbr.rel (0) target = $region13
  $region12: #{tpu_custom_call.1} parent=0 // pred_region
    _
  $region13: #{tpu_custom_call.1} parent=0 // pred_fallthru
    _
  // Predicated region
  $region14: #{tpu_custom_call.1} parent=0 // pred_check
    _
  $region15: #{tpu_custom_call.1} parent=0 // pred_check_branch
    %17 = sbr.rel (0) target = $region17
  $region16: #{tpu_custom_call.1} parent=0 // pred_region
    _
  $region17: #{tpu_custom_call.1} parent=0 // pred_fallthru
    _
  %v18 = vld [vmem:[%s0] sm:$0xf]
  %v19 = vlaneseq
  %v20 = vand.u32 %v19, 127
  %vm21 = vcmp.lt.s32.totalorder %v20, 0
  %v22 = vsub.s32 0, %v20
  %v23 = vsel %vm21, %v22, %v20
  %v24 = vshrl.u32 %v23, 6
  %v25 = vand.u32 %v23, 63
  %v26 = vsub.s32 0, %v25
  %v27 = vsel %vm21, %v26, %v25
  %vm28 = vcmp.ne.s32.totalorder %v27, 0
  %vm29 = vcmp.lt.s32.totalorder %v27, 0
  %vm30 = vmand %vm29, %vm28
  %v31 = vadd.s32 %v27, 64
  %v32 = vsel %vm30, %v31, %v27
  %vm33 = vcmp.ne.s32.totalorder %v32, 0
  %34 = vrot.lane.b32.xlu0 %v18, 1
  %v35 = vpop.permute.xlu0 %34
  %v36 = vsel %vm33, %v35, 0.0
  %vm37 = vcmp.ne.s32.totalorder %v32, 63
  %38 = vrot.lane.b32.xlu0 %v18, 127
  %v39 = vpop.permute.xlu0 %38
  %v40 = vsel %vm37, %v39, 0.0
  %v42 = vrot.slane %v18, 4
  %vm44 = vcmask 1043456
  %v45 = vsel %vm44, %v36, %v42
  %v46 = vsel %vm44, %v40, 1.0
  %v47 = vld [vmem:[%s1] sm:$0xff]
  %vm48 = vcmask 105472
  %v50 = vsel %vm48, %v47, 0
  %vm52 = vcmask 1044480
  %v54 = vsel %vm52, %v46, 0
  %56 = vmatpush.msra.mxu0 0.0
  %57 = vmatpush.msra.mxu0 0.0
  %58 = vmatpush.msra.mxu0 0.0
  %59 = vmatpush.msra.mxu0 0.0
  %60 = vmatpush.msra.mxu0 0.0
  %61 = vmatpush.msra.mxu0 0.0
  %62 = vmatpush.msra.mxu0 0.0
  %63 = vmatpush.msra.mxu0 0.0
  %64 = vmatpush.msra.mxu0 0.0
  %65 = vmatpush.msra.mxu0 0.0
  %66 = vmatpush.msra.mxu0 0.0
  %67 = vmatpush.msra.mxu0 0.0
  %68 = vmatpush.msra.mxu0 0.0
  %69 = vmatpush.msra.mxu0 0.0
  %70 = vmatpush.msra.mxu0 %v54
  %71 = vmatpush.msra.mxu0 %v45
  %72 = vmatmul.f32.gmra.mxu0 %v50
  %v73 = vpop.f32.mrf.mxu0
  %v74 = vadd.f32 0.0, %v73
  %75 = vdwg.mxu0
  %v76 = vmax.f32 %v74, 0.0
  %v77 = vld [vmem:[%s2] sm:$0xff]
  %v78 = vld [vmem:[%s2 + $0x8] sm:$0xff]
  %v79 = vld [vmem:[%s2 + $0x10] sm:$0xff]
  %v80 = vld [vmem:[%s2 + $0x18] sm:$0xff]
  %v81 = vld [vmem:[%s2 + $0x20] sm:$0xff]
  %v82 = vld [vmem:[%s2 + $0x28] sm:$0xff]
  %v83 = vld [vmem:[%s2 + $0x30] sm:$0xff]
  %v84 = vld [vmem:[%s2 + $0x38] sm:$0xff]
  %v85 = vld [vmem:[%s2 + $0x40] sm:$0xff]
  %v86 = vld [vmem:[%s2 + $0x48] sm:$0xff]
  %v87 = vld [vmem:[%s2 + $0x50] sm:$0xff]
  %v88 = vld [vmem:[%s2 + $0x58] sm:$0xff]
  %v89 = vld [vmem:[%s2 + $0x60] sm:$0xff]
  %v90 = vld [vmem:[%s2 + $0x68] sm:$0xff]
  %v91 = vld [vmem:[%s2 + $0x70] sm:$0xff]
  %v92 = vld [vmem:[%s2 + $0x78] sm:$0xff]
  %s93 = sld [smem:[#allocation2]]
  %v94 = vstv %s93
  %95 = vmatpush.msra.mxu0 %v92
  %96 = vmatpush.msra.mxu0 %v91
  %97 = vmatpush.msra.mxu0 %v90
  %98 = vmatpush.msra.mxu0 %v89
  %99 = vmatpush.msra.mxu0 %v88
  %100 = vmatpush.msra.mxu0 %v87
  %101 = vmatpush.msra.mxu0 %v86
  %102 = vmatpush.msra.mxu0 %v85
  %103 = vmatpush.msra.mxu0 %v84
  %104 = vmatpush.msra.mxu0 %v83
  %105 = vmatpush.msra.mxu0 %v82
  %106 = vmatpush.msra.mxu0 %v81
  %107 = vmatpush.msra.mxu0 %v80
  %108 = vmatpush.msra.mxu0 %v79
  %109 = vmatpush.msra.mxu0 %v78
  %110 = vmatpush.msra.mxu0 %v77
  %111 = vmatmul.f32.gmra.mxu0 %v76
  %v112 = vpop.f32.mrf.mxu0
  %v113 = vadd.f32 %v94, %v112
  %114 = vdwg.mxu0
  %v115 = vxor.u32 %v113, 2147483648
  %v116 = vmul.f32 %v115, 1.442695
  %v117 = vpow.pop %v116
  %v118 = vadd.f32 %v117, 1.0
  %v119 = vrcp.pop %v118
  %v120 = vmul.f32 %v118, %v119
  %v121 = vsub.f32 1.0, %v120
  %v122 = vmul.f32 %v119, %v121
  %v123 = vadd.f32 %v119, %v122
  %vm124 = vweird.f32 %v118
  %vm125 = vweird.f32 %v119
  %vm126 = vmor %vm124, %vm125
  %v127 = vsel %vm126, %v119, %v123
  %v128 = vand.u32 2147483647, %v118
  %vm129 = vcmp.eq.f32.partialorder %v128, 8.507059e+37
  %v130 = vand.u32 %v118, 2147483648
  %v131 = vor.u32 1.1754944e-38, %v130
  %v132 = vsel %vm129, %v131, %v127
  %v133 = vmul.f32 1.0, %v132
  %vm134 = vcmask 15360
  %135 = vst.msk [vmem:[%s4] sm:$0xff] %vm134, %v133
  // Predicated region
  $region18: #{tpu_custom_call.1} parent=0 // pred_check
    _
  $region19: #{tpu_custom_call.1} parent=0 // pred_check_branch
    %137 = sbr.rel (0) target = $region21
  $region20: #{tpu_custom_call.1} parent=0 // pred_region
    _
  $region21: #{tpu_custom_call.1} parent=0 // pred_fallthru
    _
  // Predicated region
  $region22: #{tpu_custom_call.1} parent=0 // pred_check
    _
  $region23: #{tpu_custom_call.1} parent=0 // pred_check_branch
    %139 = sbr.rel (0) target = $region25
  $region24: #{tpu_custom_call.1} parent=0 // pred_region
    _
  $region25: #{tpu_custom_call.1} parent=0 // pred_fallthru
    _

</llo_original>
